<compile_context>
chip_gen: v6e
topology: v6e:2x2x1
jax: 0.10.0
libtpu: 0.0.40
codegen_flags: <defaults>
</compile_context>

<pallas_src>
import functools

import jax
import jax.numpy as jnp
from jax.experimental import pallas as pl
from jax.experimental.pallas import tpu as pltpu


_LANE = 128  # pad the output / bias lane axis to a full lane tile


# ---------------------------------------------------------------------------
# Fused Pallas kernel (the entire policy forward, one image per program)
# ---------------------------------------------------------------------------

def _policy_kernel(patches_ref, state_ref, conv_w_ref, w1_ref, w2_ref, b_ref,
                   out_ref):
    """Fused visuomotor policy: conv(as matmul)+ReLU+GAP -> Linear+ReLU+Linear.

    patches: [1, HW, 9*C] bf16 (per-image block)   conv_w: [9*C, C_out] bf16
    state:   [1, 1, S]    bf16 (per-image block)
    w1:      [C_out + S, Hid] bf16                 w2:     [Hid, 128] bf16
    b:       [3, 128] f32  (row 0: conv_b, row 1: b1, row 2: b2; zero padded)
    out:     [1, 1, 128] f32 (per-image block; first horizon*action_dim valid)
    """
    HW = patches_ref.shape[1]
    c_out = conv_w_ref.shape[1]
    hidden = w1_ref.shape[1]

    biases = b_ref[...]                       # [3, 128] f32 (single load)
    conv_b = biases[0:1, :c_out]              # [1, C_out]
    b1 = biases[1:2, :hidden]                 # [1, Hid]
    b2 = biases[2:3, :]                       # [1, 128]

    # ---- 3x3 conv as one 2-D bf16 MXU matmul, bias, ReLU --------------------
    acc = jnp.dot(patches_ref[0], conv_w_ref[...],
                  preferred_element_type=jnp.float32)            # [HW, C_out]
    acc = jnp.maximum(acc + conv_b, 0.0)

    # ---- Per-image global average pool: [1, HW] splat-row matmul ------------
    # Constant splat (no iota / int-div / select); bf16 MXU pass, f32 accumulate.
    pool_row = jnp.full((1, HW), 1.0 / HW, jnp.bfloat16)
    vis = jnp.dot(pool_row, acc.astype(jnp.bfloat16),
                  preferred_element_type=jnp.float32)            # [1, C_out]

    # ---- MLP head; concat([vis, state]) replaced by split-weight matmuls ----
    w1 = w1_ref[...]                          # [C_out + S, Hid] bf16
    h = (jnp.dot(vis.astype(jnp.bfloat16), w1[:c_out],
                 preferred_element_type=jnp.float32)
         + jnp.dot(state_ref[0], w1[c_out:],
                   preferred_element_type=jnp.float32)
         + b1)
    h = jnp.maximum(h, 0.0)
    out_ref[0] = (jnp.dot(h.astype(jnp.bfloat16), w2_ref[...],
                          preferred_element_type=jnp.float32)
                  + b2)                                          # [1, 128]


# ---------------------------------------------------------------------------
# Single-jit wrapper: bf16 im2col glue + one pallas_call + reshape
# ---------------------------------------------------------------------------

@functools.partial(jax.jit, static_argnames=("horizon", "action_dim"))
def _policy_forward(image, robot_state, conv_w_mat, w1_cat, w2_pad, biases,
                    *, horizon, action_dim):
    B, C, H, W = image.shape
    HW = H * W

    # im2col in bf16 inside the single jit: NCHW->NHWC, pad=1, 9 shifted
    # windows concatenated along the channel axis (kernel-position major,
    # channel minor — matches conv_w_mat's [9*C_in, C_out] layout).
    x = image.astype(jnp.bfloat16).transpose(0, 2, 3, 1)          # [B, H, W, C]
    xp = jnp.pad(x, ((0, 0), (1, 1), (1, 1), (0, 0)))             # [B, H+2, W+2, C]
    patches = jnp.concatenate(
        [xp[:, di:di + H, dj:dj + W, :] for di in range(3) for dj in range(3)],
        axis=-1).reshape(B, HW, 9 * C)                            # [B, HW, 9*C] bf16

    state3 = robot_state.astype(jnp.bfloat16)[:, None, :]         # [B, 1, S]
    S = state3.shape[-1]

    out_pad = pl.pallas_call(
        _policy_kernel,
        out_shape=jax.ShapeDtypeStruct((B, 1, _LANE), jnp.float32),
        grid=(B,),
        in_specs=[
            # per-image blocks (auto double-buffered across the B grid axis)
            pl.BlockSpec((1, HW, 9 * C), lambda b: (b, 0, 0)),
            pl.BlockSpec((1, 1, S), lambda b: (b, 0, 0)),
            # weights / biases: full-array blocks, constant index -> stay
            # resident in VMEM across the whole grid (single DMA each)
            pl.BlockSpec(conv_w_mat.shape, lambda b: (0, 0)),
            pl.BlockSpec(w1_cat.shape, lambda b: (0, 0)),
            pl.BlockSpec(w2_pad.shape, lambda b: (0, 0)),
            pl.BlockSpec(biases.shape, lambda b: (0, 0)),
        ],
        out_specs=pl.BlockSpec((1, 1, _LANE), lambda b: (b, 0, 0)),
        compiler_params=pltpu.CompilerParams(
            dimension_semantics=("parallel",)),
    )(patches, state3, conv_w_mat, w1_cat, w2_pad, biases)

    return out_pad[:, 0, :horizon * action_dim].reshape(B, horizon, action_dim)


@functools.partial(jax.jit, static_argnames=("h",))
def _split_chunk(chunk, *, h):
    """Split [B, H, A] -> tuple of H arrays [B, A] in a single dispatch."""
    return tuple(chunk[:, i] for i in range(h))


# ---------------------------------------------------------------------------
# Parameter init (kernel-friendly layouts) and policy forward
# ---------------------------------------------------------------------------

def init_policy_params(key, c_in=4, c_out=16, state_dim=8, hidden=32,
                       horizon=4, action_dim=8):
    out_dim = horizon * action_dim
    assert max(c_out, hidden, out_dim) <= _LANE, "bias/output packing needs <=128 lanes"

    ks = jax.random.split(key, 6)
    conv_w = jax.random.normal(ks[0], (c_out, c_in, 3, 3), jnp.float32) * 0.1
    conv_b = jax.random.normal(ks[1], (c_out,), jnp.float32) * 0.01
    feat = c_out + state_dim
    w1 = jax.random.normal(ks[2], (feat, hidden), jnp.float32) * 0.1
    b1 = jax.random.normal(ks[3], (hidden,), jnp.float32) * 0.01
    w2 = jax.random.normal(ks[4], (hidden, out_dim), jnp.float32) * 0.1
    b2 = jax.random.normal(ks[5], (out_dim,), jnp.float32) * 0.01

    # Layouts chosen for the fused kernel:
    #  - conv as [9*C_in, C_out] matmul (kernel-position major, channel minor)
    #  - w1 kept as a single [C_out + S, hidden] slab, sliced in-kernel at a
    #    sublane-aligned row (replaces the feature concat AND a third ref)
    #  - w2 zero-padded to 128 output lanes (lane-dense, unmasked stores)
    #  - conv_b / b1 / b2 packed into one zero-padded [3, 128] f32 slab
    conv_w_mat = conv_w.transpose(2, 3, 1, 0).reshape(9 * c_in, c_out)
    w2_pad = jnp.zeros((hidden, _LANE), jnp.float32).at[:, :out_dim].set(w2)
    biases = (jnp.zeros((3, _LANE), jnp.float32)
              .at[0, :c_out].set(conv_b)
              .at[1, :hidden].set(b1)
              .at[2, :out_dim].set(b2))
    return dict(
        conv_w_mat=conv_w_mat.astype(jnp.bfloat16),
        w1_cat=w1.astype(jnp.bfloat16),
        w2_pad=w2_pad.astype(jnp.bfloat16),
        biases=biases,
        horizon=horizon, action_dim=action_dim,
    )


def policy_forward(params, image, robot_state):
    """Returns the action chunk [B, horizon, action_dim]."""
    return _policy_forward(
        image, robot_state,
        params["conv_w_mat"], params["w1_cat"], params["w2_pad"],
        params["biases"],
        horizon=params["horizon"], action_dim=params["action_dim"])


# ---------------------------------------------------------------------------
# ClosedLoopAgent state machine (host-side glue, mirrors the PyTorch module)
# ---------------------------------------------------------------------------

class ClosedLoopAgent:
    """Mirrors baselines/agents.py::ClosedLoopAgent forward() semantics."""

    def __init__(self, params, H=None):
        self._params = params
        # Tie the replan interval to the policy's chunk length: replaying
        # cache[:, t % H] is only well-defined for H <= params["horizon"].
        self._H = params["horizon"] if H is None else H
        if self._H > params["horizon"]:
            raise ValueError(
                f"H={self._H} exceeds policy horizon {params['horizon']}; "
                "cached replay would index past the action chunk.")
        self._t, self._cache = 0, None

    def reset(self):
        self._t, self._cache = 0, None

    def forward(self, image, robot_state):
        if self._H == 1:
            return policy_forward(self._params, image, robot_state)
        index = self._t % self._H
        if index == 0:
            # .detach() is an autograd no-op here; plain value.
            chunk = policy_forward(self._params, image, robot_state)
            # Split once (single extra dispatch) so every replay step is a
            # pure-Python tuple lookup with zero device dispatch.
            self._cache = _split_chunk(chunk, h=self._H)
        self._t += 1
        return self._cache[index]


# ---------------------------------------------------------------------------
# Demo
# ---------------------------------------------------------------------------

if __name__ == "__main__":
    key = jax.random.PRNGKey(0)
    k_img, k_state, k_params = jax.random.split(key, 3)

    B, C, S = 2, 4, 16
    state_dim, hidden, H, action_dim = 8, 32, 4, 8

    image = jax.random.normal(k_img, (B, C, S, S), jnp.float32)        # NCHW
    robot_state = jax.random.normal(k_state, (B, state_dim), jnp.float32)

    params = init_policy_params(k_params, c_in=C, c_out=16,
                                state_dim=state_dim, hidden=hidden,
                                horizon=H, action_dim=action_dim)

    agent = ClosedLoopAgent(params, H=H)
    agent.reset()

    # Run H+1 closed-loop steps; the fused Pallas kernel fires on step 0 and
    # again on step H, cached replay (zero dispatch) in between.
    outs = []
    for _ in range(H + 1):
        outs.append(agent.forward(image, robot_state))
    outs = [jax.block_until_ready(a) for a in outs]

    full_chunk = jax.block_until_ready(policy_forward(params, image, robot_state))
    assert outs[0].shape == (B, action_dim)
    assert full_chunk.shape == (B, H, action_dim)
    assert bool(jnp.isfinite(full_chunk).all())
    # Replayed step t must equal chunk[:, t % H].
    assert jnp.allclose(outs[1], full_chunk[:, 1], atol=1e-5)
    assert jnp.allclose(outs[H], full_chunk[:, 0], atol=1e-5)

    print("KERNEL_OK")
</pallas_src>

<mosaic_0001>
module attributes {stable_mosaic.version = 11 : i64} {
  func.func @_policy_kernel(%arg0: i32, %arg1: memref<1x256x36xbf16, #tpu.memory_space<vmem>>, %arg2: memref<1x1x8xbf16, #tpu.memory_space<vmem>>, %arg3: memref<36x16xbf16, #tpu.memory_space<vmem>>, %arg4: memref<24x32xbf16, #tpu.memory_space<vmem>>, %arg5: memref<32x128xbf16, #tpu.memory_space<vmem>>, %arg6: memref<3x128xf32, #tpu.memory_space<vmem>>, %arg7: memref<1x1x128xf32, #tpu.memory_space<vmem>>) attributes {dimension_semantics = [#tpu.dimension_semantics<parallel>], iteration_bounds = array<i64: 2>, scalar_prefetch = 0 : i64, scratch_operands = 0 : i64, tpu.core_type = #tpu.core_type<tc>, window_params = [{transform_indices = @transform_0, window_bounds = array<i64: 1, 256, 36>}, {transform_indices = @transform_1, window_bounds = array<i64: 1, 1, 8>}, {pipeline_mode = #tpu.pipeline_mode<synchronous>, transform_indices = @transform_2, window_bounds = array<i64: 36, 16>}, {pipeline_mode = #tpu.pipeline_mode<synchronous>, transform_indices = @transform_3, window_bounds = array<i64: 24, 32>}, {pipeline_mode = #tpu.pipeline_mode<synchronous>, transform_indices = @transform_4, window_bounds = array<i64: 32, 128>}, {pipeline_mode = #tpu.pipeline_mode<synchronous>, transform_indices = @transform_5, window_bounds = array<i64: 3, 128>}, {transform_indices = @transform_6, window_bounds = array<i64: 1, 1, 128>}]} {
    %c0 = arith.constant 0 : index
    %c0_0 = arith.constant 0 : index
    %0 = vector.load %arg6[%c0, %c0_0] : memref<3x128xf32, #tpu.memory_space<vmem>>, vector<3x128xf32>
    %1 = vector.extract_strided_slice %0 {offsets = [0, 0], sizes = [1, 16], strides = [1, 1]} : vector<3x128xf32> to vector<1x16xf32>
    %2 = vector.extract_strided_slice %0 {offsets = [1, 0], sizes = [1, 32], strides = [1, 1]} : vector<3x128xf32> to vector<1x32xf32>
    %3 = vector.extract_strided_slice %0 {offsets = [2, 0], sizes = [1, 128], strides = [1, 1]} : vector<3x128xf32> to vector<1x128xf32>
    %c0_1 = arith.constant 0 : index
    %c0_2 = arith.constant 0 : index
    %c0_3 = arith.constant 0 : index
    %4 = vector.load %arg1[%c0_1, %c0_2, %c0_3] : memref<1x256x36xbf16, #tpu.memory_space<vmem>>, vector<1x256x36xbf16>
    %5 = vector.shape_cast %4 : vector<1x256x36xbf16> to vector<256x36xbf16>
    %c0_4 = arith.constant 0 : index
    %c0_5 = arith.constant 0 : index
    %6 = vector.load %arg3[%c0_4, %c0_5] : memref<36x16xbf16, #tpu.memory_space<vmem>>, vector<36x16xbf16>
    %cst = arith.constant dense<0.000000e+00> : vector<256x16xf32>
    %7 = tpu.matmul %5, %6, %cst {dimension_numbers = #tpu.dot_dimension_numbers<[1], [0], [0], [1], [0, 0, 1, 1], [], []>} : vector<256x36xbf16>, vector<36x16xbf16>, vector<256x16xf32> -> vector<256x16xf32>
    %8 = vector.broadcast %1 : vector<1x16xf32> to vector<256x16xf32>
    %9 = arith.addf %7, %8 : vector<256x16xf32>
    %cst_6 = arith.constant 0.000000e+00 : f32
    %10 = vector.broadcast %cst_6 : f32 to vector<256x16xf32>
    %11 = arith.maximumf %9, %10 : vector<256x16xf32>
    %cst_7 = arith.constant 3.906250e-03 : bf16
    %12 = vector.broadcast %cst_7 : bf16 to vector<1x256xbf16>
    %13 = arith.truncf %11 : vector<256x16xf32> to vector<256x16xbf16>
    %cst_8 = arith.constant dense<0.000000e+00> : vector<1x16xf32>
    %14 = tpu.matmul %12, %13, %cst_8 {dimension_numbers = #tpu.dot_dimension_numbers<[1], [0], [0], [1], [0, 0, 1, 1], [], []>} : vector<1x256xbf16>, vector<256x16xbf16>, vector<1x16xf32> -> vector<1x16xf32>
    %c0_9 = arith.constant 0 : index
    %c0_10 = arith.constant 0 : index
    %15 = vector.load %arg4[%c0_9, %c0_10] : memref<24x32xbf16, #tpu.memory_space<vmem>>, vector<24x32xbf16>
    %16 = arith.truncf %14 : vector<1x16xf32> to vector<1x16xbf16>
    %17 = vector.extract_strided_slice %15 {offsets = [0, 0], sizes = [16, 32], strides = [1, 1]} : vector<24x32xbf16> to vector<16x32xbf16>
    %cst_11 = arith.constant dense<0.000000e+00> : vector<1x32xf32>
    %18 = tpu.matmul %16, %17, %cst_11 {dimension_numbers = #tpu.dot_dimension_numbers<[1], [0], [0], [1], [0, 0, 1, 1], [], []>} : vector<1x16xbf16>, vector<16x32xbf16>, vector<1x32xf32> -> vector<1x32xf32>
    %c0_12 = arith.constant 0 : index
    %c0_13 = arith.constant 0 : index
    %c0_14 = arith.constant 0 : index
    %19 = vector.load %arg2[%c0_12, %c0_13, %c0_14] : memref<1x1x8xbf16, #tpu.memory_space<vmem>>, vector<1x1x8xbf16>
    %20 = vector.shape_cast %19 : vector<1x1x8xbf16> to vector<1x8xbf16>
    %21 = vector.extract_strided_slice %15 {offsets = [16, 0], sizes = [8, 32], strides = [1, 1]} : vector<24x32xbf16> to vector<8x32xbf16>
    %cst_15 = arith.constant dense<0.000000e+00> : vector<1x32xf32>
    %22 = tpu.matmul %20, %21, %cst_15 {dimension_numbers = #tpu.dot_dimension_numbers<[1], [0], [0], [1], [0, 0, 1, 1], [], []>} : vector<1x8xbf16>, vector<8x32xbf16>, vector<1x32xf32> -> vector<1x32xf32>
    %23 = arith.addf %18, %22 : vector<1x32xf32>
    %24 = arith.addf %23, %2 : vector<1x32xf32>
    %cst_16 = arith.constant 0.000000e+00 : f32
    %25 = vector.broadcast %cst_16 : f32 to vector<1x32xf32>
    %26 = arith.maximumf %24, %25 : vector<1x32xf32>
    %27 = arith.truncf %26 : vector<1x32xf32> to vector<1x32xbf16>
    %c0_17 = arith.constant 0 : index
    %c0_18 = arith.constant 0 : index
    %28 = vector.load %arg5[%c0_17, %c0_18] : memref<32x128xbf16, #tpu.memory_space<vmem>>, vector<32x128xbf16>
    %cst_19 = arith.constant dense<0.000000e+00> : vector<1x128xf32>
    %29 = tpu.matmul %27, %28, %cst_19 {dimension_numbers = #tpu.dot_dimension_numbers<[1], [0], [0], [1], [0, 0, 1, 1], [], []>} : vector<1x32xbf16>, vector<32x128xbf16>, vector<1x128xf32> -> vector<1x128xf32>
    %30 = arith.addf %29, %3 : vector<1x128xf32>
    %c0_20 = arith.constant 0 : index
    %c0_21 = arith.constant 0 : index
    %c0_22 = arith.constant 0 : index
    %31 = vector.load %arg7[%c0_20, %c0_21, %c0_22] : memref<1x1x128xf32, #tpu.memory_space<vmem>>, vector<1x1x128xf32>
    %32 = vector.shape_cast %31 : vector<1x1x128xf32> to vector<1x128xf32>
    %33 = vector.shape_cast %30 : vector<1x128xf32> to vector<1x1x128xf32>
    tpu.vector_store %arg7[%c0_20, %c0_21, %c0_22], %33 {strides = array<i32>} : memref<1x1x128xf32, #tpu.memory_space<vmem>>, vector<1x1x128xf32>,
    return
  }
  func.func @transform_0(%arg0: i32) -> (i32, i32, i32) {
    %c0_i32 = arith.constant 0 : i32
    %c0_i32_0 = arith.constant 0 : i32
    %c0_i32_1 = arith.constant 0 : i32
    return %arg0, %c0_i32, %c0_i32_0 : i32, i32, i32
  }
  func.func @transform_1(%arg0: i32) -> (i32, i32, i32) {
    %c0_i32 = arith.constant 0 : i32
    %c0_i32_0 = arith.constant 0 : i32
    %c0_i32_1 = arith.constant 0 : i32
    return %arg0, %c0_i32, %c0_i32_0 : i32, i32, i32
  }
  func.func @transform_2(%arg0: i32) -> (i32, i32) {
    %c0_i32 = arith.constant 0 : i32
    %c0_i32_0 = arith.constant 0 : i32
    %c0_i32_1 = arith.constant 0 : i32
    return %c0_i32, %c0_i32_0 : i32, i32
  }
  func.func @transform_3(%arg0: i32) -> (i32, i32) {
    %c0_i32 = arith.constant 0 : i32
    %c0_i32_0 = arith.constant 0 : i32
    %c0_i32_1 = arith.constant 0 : i32
    return %c0_i32, %c0_i32_0 : i32, i32
  }
  func.func @transform_4(%arg0: i32) -> (i32, i32) {
    %c0_i32 = arith.constant 0 : i32
    %c0_i32_0 = arith.constant 0 : i32
    %c0_i32_1 = arith.constant 0 : i32
    return %c0_i32, %c0_i32_0 : i32, i32
  }
  func.func @transform_5(%arg0: i32) -> (i32, i32) {
    %c0_i32 = arith.constant 0 : i32
    %c0_i32_0 = arith.constant 0 : i32
    %c0_i32_1 = arith.constant 0 : i32
    return %c0_i32, %c0_i32_0 : i32, i32
  }
  func.func @transform_6(%arg0: i32) -> (i32, i32, i32) {
    %c0_i32 = arith.constant 0 : i32
    %c0_i32_0 = arith.constant 0 : i32
    %c0_i32_1 = arith.constant 0 : i32
    return %arg0, %c0_i32, %c0_i32_0 : i32, i32, i32
  }
}

</mosaic_0001>

<llo_original>
// kernel: squeeze.1
$region0: #{squeeze.1}
  %s0 = inlined_call_operand.vmem [shape: f32[2,32], index: 0, kind: input, shape index: {}]
  %s1 = inlined_call_operand.hbm [shape: f32[2,4,8], index: 1, kind: output, shape index: {}]
  $region1: #{squeeze.1} parent=0
    #allocation0 [shape = 'u8[4096]{0}', space=vmem, size = 0x1000, scoped, tag = 'operand span for operand 1']
    #allocation1 [shape = 's32[1]{0}', space=sflag, size = 0x4, scoped, tag = 'scoped memory for squeeze.1']
    #allocation2 [shape = 'u8[8192]{0}', space=vmem, size = 0x2000, scoped, tag = 'scoped mem for output reshape']
    #allocation3 [shape = 'u8[4096]{0}', space=vmem, size = 0x1000, scoped, tag = 'scoped mem for input reshape']
    %2 = vsyncpa [#allocation1], 0
    %s4 = sshll.u32 1, 2
    %s5 = ssub.s32 %s4, 1
    %v6 = vld [vmem:[%s0] sm:%s5]
    %7 = vst [vmem:[#allocation3] sm:%s5] %v6
    %v8 = vld [vmem:[#allocation3] sm:$0x3]
    %vm9 = vcmask 64512
    %10 = vst.msk [vmem:[#allocation2] ss:$8 sm:$0x3] %vm9, %v8
    %v11 = vld [vmem:[#allocation3] sm:$0x3]
    %12 = vrot.lane.b32.xlu0 %v11, 120
    %v13 = vpop.permute.xlu0 %12
    %vm14 = vcmask 64512
    %s15 = scalar_lea.vmem [#allocation2], 1
    %16 = vst.msk [vmem:[%s15] ss:$8 sm:$0x3] %vm14, %v13
    %v17 = vld [vmem:[#allocation3] sm:$0x3]
    %18 = vrot.lane.b32.xlu0 %v17, 112
    %v19 = vpop.permute.xlu0 %18
    %vm20 = vcmask 64512
    %s21 = scalar_lea.vmem [#allocation2], 2
    %22 = vst.msk [vmem:[%s21] ss:$8 sm:$0x3] %vm20, %v19
    %v23 = vld [vmem:[#allocation3] sm:$0x3]
    %24 = vrot.lane.b32.xlu0 %v23, 104
    %v25 = vpop.permute.xlu0 %24
    %vm26 = vcmask 64512
    %s27 = scalar_lea.vmem [#allocation2], 3
    %28 = vst.msk [vmem:[%s27] ss:$8 sm:$0x3] %vm26, %v25
    %s30 = sshll.u32 1, 4
    %s31 = ssub.s32 %s30, 1
    %v33 = vld [vmem:[#allocation2] sm:%s31]
    %s34 = sshll.u32 1, 4
    %s35 = ssub.s32 %s34, 1
    %36 = vst [vmem:[#allocation0] sm:%s35] %v33
    %s37 = scalar_lea.vmem [#allocation2], 8
    %v38 = vld [vmem:[%s37] sm:%s31]
    %s39 = sshll.u32 1, 4
    %s40 = ssub.s32 %s39, 1
    %s41 = scalar_lea.vmem [#allocation0], 4
    %42 = vst [vmem:[%s41] sm:%s40] %v38
    %s44 = ssub.s32 128, 128
    %45 = vsyncadd [#allocation1], %s44
    %s47 = sshll.u32 [#allocation0], 4
    %s48 = int_to_ptr.vmem [resolvable:$true] %s47
    %50 = dma.vmem_to_hbm [thread:$0]  %s48, 128, %s1, [#allocation1]
    %51 = dma.done [#allocation1], 128
    %52 = vsyncpa [#allocation1], 1

// kernel: _policy_forward.1
$region0: #{_policy_forward.1}
  #allocation0 [shape = 'u32[]', space=smem, size = 0x4, offset = 0x4, fixed_abs, tag = 'smem constant byte address 0x4 - core index']
  #allocation1 [shape = 'u32[144,128]{1,0:T(1,128)}', space=vmem, size = 0x12000, scoped, tag = 'internal scratch']
  %s0 = inlined_call_operand.vmem [shape: bf16[2,256,36], index: 0, kind: input, shape index: {}]
  %s1 = inlined_call_operand.vmem [shape: bf16[2,1,8], index: 1, kind: input, shape index: {}]
  %s2 = inlined_call_operand.vmem [shape: bf16[36,16], index: 2, kind: input, shape index: {}]
  %s3 = inlined_call_operand.vmem [shape: bf16[24,32], index: 3, kind: input, shape index: {}]
  %s4 = inlined_call_operand.vmem [shape: bf16[32,128], index: 4, kind: input, shape index: {}]
  %s5 = inlined_call_operand.vmem [shape: f32[3,128], index: 5, kind: input, shape index: {}]
  %s6 = inlined_call_operand.vmem [shape: f32[2,1,128], index: 6, kind: output, shape index: {}]
  %s7 = sld [smem:[#allocation0]]
  $region57: #{_policy_forward.1} parent=0
    _
  %s9 = ssub.s32 1, %s7
  %s10 = scalar_select 0, %s9, %s7
  loop: start=0, step=1, limit=4
  $region2: #{_policy_forward.1} parent=0 // loop_pre_header
    _
  $region3: #{_policy_forward.1} parent=0 // loop_header
    %s12 = sphi 0, %s16
    %p13 = scmp.ge.s32.totalorder %s12, 4
    %s22 = sphi 0, %s24
    %s25 = sphi 0, %s22
    %s26 = sphi 0, %s25
    %s42 = sphi 0, %s26
    %s48 = sphi 0, %s50
    %s51 = sphi 0, %s48
    %s52 = sphi 0, %s51
    %s68 = sphi 0, %s52
    %s72 = sphi 0, %s72
    %s74 = sphi 0, %s72
    %s75 = sphi 0, %s74
    %s89 = sphi 0, %s75
    %s93 = sphi 0, %s93
    %s95 = sphi 0, %s93
    %s96 = sphi 0, %s95
    %s110 = sphi 0, %s96
    %s114 = sphi 0, %s114
    %s116 = sphi 0, %s114
    %s117 = sphi 0, %s116
    %s131 = sphi 0, %s117
    %s135 = sphi 0, %s135
    %s137 = sphi 0, %s135
    %s138 = sphi 0, %s137
    %s152 = sphi 0, %s138
    %s158 = sphi 0, %s160
    %s161 = sphi 0, %s158
    %s162 = sphi 0, %s161
    %s178 = sphi 0, %s162
  $region4: #{_policy_forward.1} parent=0 // loop_header_branch
    %15 = sbr.rel (%p13) target = $region8
  $region5: #{_policy_forward.1} parent=0 // loop_body
    %s17 = ssub.s32 %s12, 1
    %s18 = ssub.s32 %s12, 2
    %s19 = sadd.s32 %s12, 1
    %s20 = ssub.s32 %s12, %s19
    %p21 = scmp.eq.s32.totalorder %s20, 0
    %s23 = sadd.s32 %s22, 1
    %s24 = scalar_select %p21, %s22, %s23
    %p27 = pneg %p21
    %p28 = scmp.eq.s32.totalorder %s12, 1
    %p29 = por %p27, %p28
    %p30 = scmp.ne.s32.totalorder %s22, %s25
    %p31 = scmp.eq.s32.totalorder %s12, 0
    %p32 = por %p30, %p31
    %p33 = scmp.ne.s32.totalorder %s22, %s25
    %p34 = scmp.eq.s32.totalorder %s17, 1
    %p35 = por %p33, %p34
    %p36 = scmp.ne.s32.totalorder %s25, %s26
    %p37 = scmp.eq.s32.totalorder %s17, 0
    %p38 = por %p36, %p37
    %p39 = scmp.ne.s32.totalorder %s25, %s26
    %p40 = scmp.eq.s32.totalorder %s18, 1
    %p41 = por %p39, %p40
    %p43 = scmp.ne.s32.totalorder %s26, %s42
    %p44 = scmp.eq.s32.totalorder %s18, 0
    %p45 = por %p43, %p44
    %s46 = ssub.s32 %s12, %s19
    %p47 = scmp.eq.s32.totalorder %s46, 0
    %s49 = sadd.s32 %s48, 1
    %s50 = scalar_select %p47, %s48, %s49
    %p53 = pneg %p47
    %p54 = scmp.eq.s32.totalorder %s12, 1
    %p55 = por %p53, %p54
    %p56 = scmp.ne.s32.totalorder %s48, %s51
    %p57 = scmp.eq.s32.totalorder %s12, 0
    %p58 = por %p56, %p57
    %p59 = scmp.ne.s32.totalorder %s48, %s51
    %p60 = scmp.eq.s32.totalorder %s17, 1
    %p61 = por %p59, %p60
    %p62 = scmp.ne.s32.totalorder %s51, %s52
    %p63 = scmp.eq.s32.totalorder %s17, 0
    %p64 = por %p62, %p63
    %p65 = scmp.ne.s32.totalorder %s51, %s52
    %p66 = scmp.eq.s32.totalorder %s18, 1
    %p67 = por %p65, %p66
    %p69 = scmp.ne.s32.totalorder %s52, %s68
    %p70 = scmp.eq.s32.totalorder %s18, 0
    %p71 = por %p69, %p70
    %s73 = sadd.s32 %s72, 1
    %p76 = scmp.eq.s32.totalorder %s12, 1
    %p77 = scmp.ne.s32.totalorder %s72, %s74
    %p78 = scmp.eq.s32.totalorder %s12, 0
    %p79 = por %p77, %p78
    %p80 = scmp.ne.s32.totalorder %s72, %s74
    %p81 = scmp.eq.s32.totalorder %s17, 1
    %p82 = por %p80, %p81
    %p83 = scmp.ne.s32.totalorder %s74, %s75
    %p84 = scmp.eq.s32.totalorder %s17, 0
    %p85 = por %p83, %p84
    %p86 = scmp.ne.s32.totalorder %s74, %s75
    %p87 = scmp.eq.s32.totalorder %s18, 1
    %p88 = por %p86, %p87
    %p90 = scmp.ne.s32.totalorder %s75, %s89
    %p91 = scmp.eq.s32.totalorder %s18, 0
    %p92 = por %p90, %p91
    %s94 = sadd.s32 %s93, 1
    %p97 = scmp.eq.s32.totalorder %s12, 1
    %p98 = scmp.ne.s32.totalorder %s93, %s95
    %p99 = scmp.eq.s32.totalorder %s12, 0
    %p100 = por %p98, %p99
    %p101 = scmp.ne.s32.totalorder %s93, %s95
    %p102 = scmp.eq.s32.totalorder %s17, 1
    %p103 = por %p101, %p102
    %p104 = scmp.ne.s32.totalorder %s95, %s96
    %p105 = scmp.eq.s32.totalorder %s17, 0
    %p106 = por %p104, %p105
    %p107 = scmp.ne.s32.totalorder %s95, %s96
    %p108 = scmp.eq.s32.totalorder %s18, 1
    %p109 = por %p107, %p108
    %p111 = scmp.ne.s32.totalorder %s96, %s110
    %p112 = scmp.eq.s32.totalorder %s18, 0
    %p113 = por %p111, %p112
    %s115 = sadd.s32 %s114, 1
    %p118 = scmp.eq.s32.totalorder %s12, 1
    %p119 = scmp.ne.s32.totalorder %s114, %s116
    %p120 = scmp.eq.s32.totalorder %s12, 0
    %p121 = por %p119, %p120
    %p122 = scmp.ne.s32.totalorder %s114, %s116
    %p123 = scmp.eq.s32.totalorder %s17, 1
    %p124 = por %p122, %p123
    %p125 = scmp.ne.s32.totalorder %s116, %s117
    %p126 = scmp.eq.s32.totalorder %s17, 0
    %p127 = por %p125, %p126
    %p128 = scmp.ne.s32.totalorder %s116, %s117
    %p129 = scmp.eq.s32.totalorder %s18, 1
    %p130 = por %p128, %p129
    %p132 = scmp.ne.s32.totalorder %s117, %s131
    %p133 = scmp.eq.s32.totalorder %s18, 0
    %p134 = por %p132, %p133
    %s136 = sadd.s32 %s135, 1
    %p139 = scmp.eq.s32.totalorder %s12, 1
    %p140 = scmp.ne.s32.totalorder %s135, %s137
    %p141 = scmp.eq.s32.totalorder %s12, 0
    %p142 = por %p140, %p141
    %p143 = scmp.ne.s32.totalorder %s135, %s137
    %p144 = scmp.eq.s32.totalorder %s17, 1
    %p145 = por %p143, %p144
    %p146 = scmp.ne.s32.totalorder %s137, %s138
    %p147 = scmp.eq.s32.totalorder %s17, 0
    %p148 = por %p146, %p147
    %p149 = scmp.ne.s32.totalorder %s137, %s138
    %p150 = scmp.eq.s32.totalorder %s18, 1
    %p151 = por %p149, %p150
    %p153 = scmp.ne.s32.totalorder %s138, %s152
    %p154 = scmp.eq.s32.totalorder %s18, 0
    %p155 = por %p153, %p154
    %s156 = ssub.s32 %s12, %s19
    %p157 = scmp.eq.s32.totalorder %s156, 0
    %s159 = sadd.s32 %s158, 1
    %s160 = scalar_select %p157, %s158, %s159
    %p163 = pneg %p157
    %p164 = scmp.eq.s32.totalorder %s12, 1
    %p165 = por %p163, %p164
    %p166 = scmp.ne.s32.totalorder %s158, %s161
    %p167 = scmp.eq.s32.totalorder %s12, 0
    %p168 = por %p166, %p167
    %p169 = scmp.ne.s32.totalorder %s158, %s161
    %p170 = scmp.eq.s32.totalorder %s17, 1
    %p171 = por %p169, %p170
    %p172 = scmp.ne.s32.totalorder %s161, %s162
    %p173 = scmp.eq.s32.totalorder %s17, 0
    %p174 = por %p172, %p173
    %p175 = scmp.ne.s32.totalorder %s161, %s162
    %p176 = scmp.eq.s32.totalorder %s18, 1
    %p177 = por %p175, %p176
    %p179 = scmp.ne.s32.totalorder %s162, %s178
    %p180 = scmp.eq.s32.totalorder %s18, 0
    %p181 = por %p179, %p180
    %p182 = scmp.le.s32.totalorder 1, %s12
    %p183 = scmp.lt.s32.totalorder %s12, 3
    %p184 = pnand %p182, %p183
    %p185 = pneg %p184
    // Predicated region
    $region9: #{_policy_forward.1} parent=5 // pred_check
      _
    $region10: #{_policy_forward.1} parent=5 // pred_check_branch
      %187 = sbr.rel (%p184) target = $region12
    $region11: #{_policy_forward.1} parent=5 // pred_region
      %s188 = ssub.s32 %s12, 1
      // Predicated region
      $region13: #{_policy_forward.1} parent=11 // pred_check
        %p189 = pneg %p85
      $region14: #{_policy_forward.1} parent=11 // pred_check_branch
        %191 = sbr.rel (%p189) target = $region16
      $region15: #{_policy_forward.1} parent=11 // pred_region
        _
      $region16: #{_policy_forward.1} parent=11 // pred_fallthru
        _
      // Predicated region
      $region17: #{_policy_forward.1} parent=11 // pred_check
        %p192 = pneg %p106
      $region18: #{_policy_forward.1} parent=11 // pred_check_branch
        %194 = sbr.rel (%p192) target = $region20
      $region19: #{_policy_forward.1} parent=11 // pred_region
        _
      $region20: #{_policy_forward.1} parent=11 // pred_fallthru
        _
      // Predicated region
      $region21: #{_policy_forward.1} parent=11 // pred_check
        %p195 = pneg %p127
      $region22: #{_policy_forward.1} parent=11 // pred_check_branch
        %197 = sbr.rel (%p195) target = $region24
      $region23: #{_policy_forward.1} parent=11 // pred_region
        _
      $region24: #{_policy_forward.1} parent=11 // pred_fallthru
        _
      // Predicated region
      $region25: #{_policy_forward.1} parent=11 // pred_check
        %p198 = pneg %p148
      $region26: #{_policy_forward.1} parent=11 // pred_check_branch
        %200 = sbr.rel (%p198) target = $region28
      $region27: #{_policy_forward.1} parent=11 // pred_region
        _
      $region28: #{_policy_forward.1} parent=11 // pred_fallthru
        _
    $region12: #{_policy_forward.1} parent=5 // pred_fallthru
      _
    %p201 = scmp.lt.s32.totalorder %s12, 2
    // Predicated region
    $region29: #{_policy_forward.1} parent=5 // pred_check
      %p202 = pneg %p201
    $region30: #{_policy_forward.1} parent=5 // pred_check_branch
      %204 = sbr.rel (%p202) target = $region32
    $region31: #{_policy_forward.1} parent=5 // pred_region
      // Predicated region
      $region33: #{_policy_forward.1} parent=31 // pred_check
        %p205 = pneg %p32
      $region34: #{_policy_forward.1} parent=31 // pred_check_branch
        %207 = sbr.rel (%p205) target = $region36
      $region35: #{_policy_forward.1} parent=31 // pred_region
        %p208 = scmp.lt.s32.totalorder %s12, 1
        %s209 = scalar_select %p208, %s12, 1
        %s210 = smul.addr %s209, 32
        %s211 = smul.addr %s210, 4
        %s212 = scalar_lea.vmem %s0, %s211
      $region36: #{_policy_forward.1} parent=31 // pred_fallthru
        _
      // Predicated region
      $region37: #{_policy_forward.1} parent=31 // pred_check
        %p213 = pneg %p58
      $region38: #{_policy_forward.1} parent=31 // pred_check_branch
        %215 = sbr.rel (%p213) target = $region40
      $region39: #{_policy_forward.1} parent=31 // pred_region
        %p216 = scmp.lt.s32.totalorder %s12, 1
        %s217 = scalar_select %p216, %s12, 1
        %s218 = scalar_lea.vmem %s1, %s217
      $region40: #{_policy_forward.1} parent=31 // pred_fallthru
        _
    $region32: #{_policy_forward.1} parent=5 // pred_fallthru
      _
    %p219 = scmp.le.s32.totalorder 1, %s12
    %p220 = scmp.lt.s32.totalorder %s12, 3
    %p221 = pnand %p219, %p220
    %p222 = pneg %p221
    // Predicated region
    $region41: #{_policy_forward.1} parent=5 // pred_check
      _
    $region42: #{_policy_forward.1} parent=5 // pred_check_branch
      %224 = sbr.rel (%p221) target = $region44
    $region43: #{_policy_forward.1} parent=5 // pred_region
      %s225 = ssub.s32 %s12, 1
      %p226 = scmp.lt.s32.totalorder %s17, 1
      %s227 = scalar_select %p226, %s17, 1
      %s228 = smul.addr %s227, 32
      %s229 = smul.addr %s228, 4
      %s230 = scalar_lea.vmem %s0, %s229
      %p231 = pneg %p38
      %p232 = pneg %p35
      %p233 = scmp.lt.s32.totalorder %s17, 1
      %s234 = scalar_select %p233, %s17, 1
      %s235 = scalar_lea.vmem %s1, %s234
      %p236 = pneg %p64
      %p237 = pneg %p61
      %p238 = pneg %p85
      %p239 = pneg %p82
      %p240 = pneg %p106
      %p241 = pneg %p103
      %p242 = pneg %p127
      %p243 = pneg %p124
      %p244 = pneg %p148
      %p245 = pneg %p145
      %p246 = pneg %p174
      %p247 = pneg %p171
      %p248 = scmp.lt.s32.totalorder %s17, 1
      %s249 = scalar_select %p248, %s17, 1
      %s250 = scalar_lea.vmem %s6, %s249
      %p251 = scmp.lt.s32.totalorder %s17, 1
      %s252 = scalar_select %p251, %s17, 1
      %s253 = smul.addr %s252, 32
      %s254 = smul.addr %s253, 4
      %s255 = scalar_lea.vmem %s0, %s254
      %p256 = scmp.lt.s32.totalorder %s17, 1
      %s257 = scalar_select %p256, %s17, 1
      %s258 = scalar_lea.vmem %s1, %s257
      %p259 = scmp.lt.s32.totalorder %s17, 1
      %s260 = scalar_select %p259, %s17, 1
      %s261 = scalar_lea.vmem %s6, %s260
      %v264 = vld [vmem:[%s5] sm:$0x7]
      %v265 = vld [vmem:[%s255] sm:$0xf]
      %v266 = vld [vmem:[%s255 + $0x4] sm:$0xf]
      %v267 = vld [vmem:[%s255 + $0x8] sm:$0xf]
      %v268 = vld [vmem:[%s255 + $0xc] sm:$0xf]
      %v269 = vld [vmem:[%s255 + $0x10] sm:$0xf]
      %v270 = vld [vmem:[%s255 + $0x14] sm:$0xf]
      %v271 = vld [vmem:[%s255 + $0x18] sm:$0xf]
      %v272 = vld [vmem:[%s255 + $0x1c] sm:$0xf]
      %v273 = vld [vmem:[%s255 + $0x20] sm:$0xf]
      %v274 = vld [vmem:[%s255 + $0x24] sm:$0xf]
      %v275 = vld [vmem:[%s255 + $0x28] sm:$0xf]
      %v276 = vld [vmem:[%s255 + $0x2c] sm:$0xf]
      %v277 = vld [vmem:[%s255 + $0x30] sm:$0xf]
      %v278 = vld [vmem:[%s255 + $0x34] sm:$0xf]
      %v279 = vld [vmem:[%s255 + $0x38] sm:$0xf]
      %v280 = vld [vmem:[%s255 + $0x3c] sm:$0xf]
      %v281 = vld [vmem:[%s255 + $0x40] sm:$0xf]
      %v282 = vld [vmem:[%s255 + $0x44] sm:$0xf]
      %v283 = vld [vmem:[%s255 + $0x48] sm:$0xf]
      %v284 = vld [vmem:[%s255 + $0x4c] sm:$0xf]
      %v285 = vld [vmem:[%s255 + $0x50] sm:$0xf]
      %v286 = vld [vmem:[%s255 + $0x54] sm:$0xf]
      %v287 = vld [vmem:[%s255 + $0x58] sm:$0xf]
      %v288 = vld [vmem:[%s255 + $0x5c] sm:$0xf]
      %v289 = vld [vmem:[%s255 + $0x60] sm:$0xf]
      %v290 = vld [vmem:[%s255 + $0x64] sm:$0xf]
      %v291 = vld [vmem:[%s255 + $0x68] sm:$0xf]
      %v292 = vld [vmem:[%s255 + $0x6c] sm:$0xf]
      %v293 = vld [vmem:[%s255 + $0x70] sm:$0xf]
      %v294 = vld [vmem:[%s255 + $0x74] sm:$0xf]
      %v295 = vld [vmem:[%s255 + $0x78] sm:$0xf]
      %v296 = vld [vmem:[%s255 + $0x7c] sm:$0xf]
      %v297 = vld [vmem:[%s2] sm:$0xf]
      %v298 = vld [vmem:[%s2 + $0x4] sm:$0xf]
      %v299 = vld [vmem:[%s2 + $0x8] sm:$0xf]
      %v300 = vld [vmem:[%s2 + $0xc] sm:$0xf]
      %v301 = vld [vmem:[%s2 + $0x10] sm:$0x3]
      %v302 = vlaneseq
      %v303 = vshrl.u32 %v302, 7
      %v304 = vsub.s32 0, %v303
      %v305 = vrot.slane %v264, %v304
      %v338 = vunpack.c.l.b16 %v265
      %v339 = vunpack.c.l.b16 %v266
      %v340 = vunpack.c.l.b16 %v267
      %v341 = vunpack.c.l.b16 %v268
      %v342 = vunpack.c.l.b16 %v269
      %v343 = vunpack.c.l.b16 %v270
      %v344 = vunpack.c.l.b16 %v271
      %v345 = vunpack.c.l.b16 %v272
      %v346 = vunpack.c.l.b16 %v273
      %v347 = vunpack.c.l.b16 %v274
      %v348 = vunpack.c.l.b16 %v275
      %v349 = vunpack.c.l.b16 %v276
      %v350 = vunpack.c.l.b16 %v277
      %v351 = vunpack.c.l.b16 %v278
      %v352 = vunpack.c.l.b16 %v279
      %v353 = vunpack.c.l.b16 %v280
      %v354 = vunpack.c.l.b16 %v281
      %v355 = vunpack.c.l.b16 %v282
      %v356 = vunpack.c.l.b16 %v283
      %v357 = vunpack.c.l.b16 %v284
      %v358 = vunpack.c.l.b16 %v285
      %v359 = vunpack.c.l.b16 %v286
      %v360 = vunpack.c.l.b16 %v287
      %v361 = vunpack.c.l.b16 %v288
      %v362 = vunpack.c.l.b16 %v289
      %v363 = vunpack.c.l.b16 %v290
      %v364 = vunpack.c.l.b16 %v291
      %v365 = vunpack.c.l.b16 %v292
      %v366 = vunpack.c.l.b16 %v293
      %v367 = vunpack.c.l.b16 %v294
      %v368 = vunpack.c.l.b16 %v295
      %v369 = vunpack.c.l.b16 %v296
      %v370 = vpack.c.b16 %v339, %v338
      %v371 = vpack.c.b16 %v341, %v340
      %v372 = vpack.c.b16 %v343, %v342
      %v373 = vpack.c.b16 %v345, %v344
      %v374 = vpack.c.b16 %v347, %v346
      %v375 = vpack.c.b16 %v349, %v348
      %v376 = vpack.c.b16 %v351, %v350
      %v377 = vpack.c.b16 %v353, %v352
      %v378 = vpack.c.b16 %v355, %v354
      %v379 = vpack.c.b16 %v357, %v356
      %v380 = vpack.c.b16 %v359, %v358
      %v381 = vpack.c.b16 %v361, %v360
      %v382 = vpack.c.b16 %v363, %v362
      %v383 = vpack.c.b16 %v365, %v364
      %v384 = vpack.c.b16 %v367, %v366
      %v385 = vpack.c.b16 %v369, %v368
      %v391 = vunpack.c.l.b16 %v297
      %v392 = vunpack.c.l.b16 %v298
      %v393 = vunpack.c.l.b16 %v299
      %v394 = vunpack.c.l.b16 %v300
      %v395 = vunpack.c.l.b16 %v301
      %v396 = vpack.c.b16 %v392, %v391
      %v397 = vpack.c.b16 %v394, %v393
      %v398 = vpack.c.b16 %v395, %v395
      %vm401 = vcmask 293888
      %v403 = vsel %vm401, %v370, 0
      %v406 = vsel %vm401, %v371, 0
      %v409 = vsel %vm401, %v372, 0
      %v412 = vsel %vm401, %v373, 0
      %v415 = vsel %vm401, %v374, 0
      %v418 = vsel %vm401, %v375, 0
      %v421 = vsel %vm401, %v376, 0
      %v424 = vsel %vm401, %v377, 0
      %v427 = vsel %vm401, %v378, 0
      %v430 = vsel %vm401, %v379, 0
      %v433 = vsel %vm401, %v380, 0
      %v436 = vsel %vm401, %v381, 0
      %v439 = vsel %vm401, %v382, 0
      %v442 = vsel %vm401, %v383, 0
      %v445 = vsel %vm401, %v384, 0
      %v448 = vsel %vm401, %v385, 0
      %vm450 = vcmask 1041408
      %v452 = vsel %vm450, %v398, 0
      %454 = vmatprep.subr.bf16.mxu0 0
      %455 = vmatpush1.bf16.msra.mxu0 0
      %456 = vmatprep.subr.bf16.mxu0 0
      %457 = vmatpush1.bf16.msra.mxu0 0
      %458 = vmatprep.subr.bf16.mxu0 0
      %459 = vmatpush1.bf16.msra.mxu0 0
      %460 = vmatprep.subr.bf16.mxu0 0
      %461 = vmatpush1.bf16.msra.mxu0 0
      %462 = vmatprep.subr.bf16.mxu0 0
      %463 = vmatpush1.bf16.msra.mxu0 0
      %464 = vmatprep.subr.bf16.mxu0 0
      %465 = vmatpush1.bf16.msra.mxu0 %v452
      %466 = vmatprep.subr.bf16.mxu0 0
      %467 = vmatpush1.bf16.msra.mxu0 %v397
      %468 = vmatprep.subr.bf16.mxu0 0
      %469 = vmatpush1.bf16.msra.mxu0 %v396
      %470 = vmatprep.subr.bf16.mxu0 0
      %471 = vmatpush2.bf16.msra.mxu0 0
      %472 = vmatprep.subr.bf16.mxu0 0
      %473 = vmatpush2.bf16.msra.mxu0 0
      %474 = vmatprep.subr.bf16.mxu0 0
      %475 = vmatpush2.bf16.msra.mxu0 0
      %476 = vmatprep.subr.bf16.mxu0 0
      %477 = vmatpush2.bf16.msra.mxu0 0
      %478 = vmatprep.subr.bf16.mxu0 0
      %479 = vmatpush2.bf16.msra.mxu0 0
      %480 = vmatprep.subr.bf16.mxu0 0
      %481 = vmatpush2.bf16.msra.mxu0 0
      %482 = vmatprep.subr.bf16.mxu0 0
      %483 = vmatpush2.bf16.msra.mxu0 0
      %484 = vmatprep.subr.bf16.mxu0 0
      %485 = vmatpush2.bf16.msra.mxu0 0
      %486 = vmatprep.mubr.bf16.mxu0 0
      %487 = vmatmul.mubr.bf16.gmra.mxu0 %v403
      %v488 = vpop.f32.mrf.mxu0
      %v489 = vadd.f32 %v305, %v488
      %v490 = vpop.f32.mrf.mxu0
      %v491 = vpop.f32.mrf.mxu0
      %v492 = vadd.f32 %v305, %v491
      %v493 = vpop.f32.mrf.mxu0
      %494 = vmatprep.mubr.bf16.mxu0 0
      %495 = vmatmul.mubr.bf16.gmra.mxu0 %v406
      %v496 = vpop.f32.mrf.mxu0
      %v497 = vadd.f32 %v305, %v496
      %v498 = vpop.f32.mrf.mxu0
      %v499 = vpop.f32.mrf.mxu0
      %v500 = vadd.f32 %v305, %v499
      %v501 = vpop.f32.mrf.mxu0
      %502 = vmatprep.mubr.bf16.mxu0 0
      %503 = vmatmul.mubr.bf16.gmra.mxu0 %v409
      %v504 = vpop.f32.mrf.mxu0
      %v505 = vadd.f32 %v305, %v504
      %v506 = vpop.f32.mrf.mxu0
      %v507 = vpop.f32.mrf.mxu0
      %v508 = vadd.f32 %v305, %v507
      %v509 = vpop.f32.mrf.mxu0
      %510 = vmatprep.mubr.bf16.mxu0 0
      %511 = vmatmul.mubr.bf16.gmra.mxu0 %v412
      %v512 = vpop.f32.mrf.mxu0
      %v513 = vadd.f32 %v305, %v512
      %v514 = vpop.f32.mrf.mxu0
      %v515 = vpop.f32.mrf.mxu0
      %v516 = vadd.f32 %v305, %v515
      %v517 = vpop.f32.mrf.mxu0
      %518 = vmatprep.mubr.bf16.mxu0 0
      %519 = vmatmul.mubr.bf16.gmra.mxu0 %v415
      %v520 = vpop.f32.mrf.mxu0
      %v521 = vadd.f32 %v305, %v520
      %v522 = vpop.f32.mrf.mxu0
      %v523 = vpop.f32.mrf.mxu0
      %v524 = vadd.f32 %v305, %v523
      %v525 = vpop.f32.mrf.mxu0
      %526 = vmatprep.mubr.bf16.mxu0 0
      %527 = vmatmul.mubr.bf16.gmra.mxu0 %v418
      %v528 = vpop.f32.mrf.mxu0
      %v529 = vadd.f32 %v305, %v528
      %v530 = vpop.f32.mrf.mxu0
      %v531 = vpop.f32.mrf.mxu0
      %v532 = vadd.f32 %v305, %v531
      %v533 = vpop.f32.mrf.mxu0
      %534 = vmatprep.mubr.bf16.mxu0 0
      %535 = vmatmul.mubr.bf16.gmra.mxu0 %v421
      %v536 = vpop.f32.mrf.mxu0
      %v537 = vadd.f32 %v305, %v536
      %v538 = vpop.f32.mrf.mxu0
      %v539 = vpop.f32.mrf.mxu0
      %v540 = vadd.f32 %v305, %v539
      %v541 = vpop.f32.mrf.mxu0
      %542 = vmatprep.mubr.bf16.mxu0 0
      %543 = vmatmul.mubr.bf16.gmra.mxu0 %v424
      %v544 = vpop.f32.mrf.mxu0
      %v545 = vadd.f32 %v305, %v544
      %v546 = vpop.f32.mrf.mxu0
      %v547 = vpop.f32.mrf.mxu0
      %v548 = vadd.f32 %v305, %v547
      %v549 = vpop.f32.mrf.mxu0
      %550 = vmatprep.mubr.bf16.mxu0 0
      %551 = vmatmul.mubr.bf16.gmra.mxu0 %v427
      %v552 = vpop.f32.mrf.mxu0
      %v553 = vadd.f32 %v305, %v552
      %v554 = vpop.f32.mrf.mxu0
      %v555 = vpop.f32.mrf.mxu0
      %v556 = vadd.f32 %v305, %v555
      %v557 = vpop.f32.mrf.mxu0
      %558 = vmatprep.mubr.bf16.mxu0 0
      %559 = vmatmul.mubr.bf16.gmra.mxu0 %v430
      %v560 = vpop.f32.mrf.mxu0
      %v561 = vadd.f32 %v305, %v560
      %v562 = vpop.f32.mrf.mxu0
      %v563 = vpop.f32.mrf.mxu0
      %v564 = vadd.f32 %v305, %v563
      %v565 = vpop.f32.mrf.mxu0
      %566 = vmatprep.mubr.bf16.mxu0 0
      %567 = vmatmul.mubr.bf16.gmra.mxu0 %v433
      %v568 = vpop.f32.mrf.mxu0
      %v569 = vadd.f32 %v305, %v568
      %v570 = vpop.f32.mrf.mxu0
      %v571 = vpop.f32.mrf.mxu0
      %v572 = vadd.f32 %v305, %v571
      %v573 = vpop.f32.mrf.mxu0
      %574 = vmatprep.mubr.bf16.mxu0 0
      %575 = vmatmul.mubr.bf16.gmra.mxu0 %v436
      %v576 = vpop.f32.mrf.mxu0
      %v577 = vadd.f32 %v305, %v576
      %v578 = vpop.f32.mrf.mxu0
      %v579 = vpop.f32.mrf.mxu0
      %v580 = vadd.f32 %v305, %v579
      %v581 = vpop.f32.mrf.mxu0
      %582 = vmatprep.mubr.bf16.mxu0 0
      %583 = vmatmul.mubr.bf16.gmra.mxu0 %v439
      %v584 = vpop.f32.mrf.mxu0
      %v585 = vadd.f32 %v305, %v584
      %v586 = vpop.f32.mrf.mxu0
      %v587 = vpop.f32.mrf.mxu0
      %v588 = vadd.f32 %v305, %v587
      %v589 = vpop.f32.mrf.mxu0
      %590 = vmatprep.mubr.bf16.mxu0 0
      %591 = vmatmul.mubr.bf16.gmra.mxu0 %v442
      %v592 = vpop.f32.mrf.mxu0
      %v593 = vadd.f32 %v305, %v592
      %v594 = vpop.f32.mrf.mxu0
      %v595 = vpop.f32.mrf.mxu0
      %v596 = vadd.f32 %v305, %v595
      %v597 = vpop.f32.mrf.mxu0
      %598 = vmatprep.mubr.bf16.mxu0 0
      %599 = vmatmul.mubr.bf16.gmra.mxu0 %v445
      %v600 = vpop.f32.mrf.mxu0
      %v601 = vadd.f32 %v305, %v600
      %v602 = vpop.f32.mrf.mxu0
      %v603 = vpop.f32.mrf.mxu0
      %v604 = vadd.f32 %v305, %v603
      %v605 = vpop.f32.mrf.mxu0
      %606 = vmatprep.mubr.bf16.mxu0 0
      %607 = vmatmul.mubr.bf16.gmra.mxu0 %v448
      %v608 = vpop.f32.mrf.mxu0
      %v609 = vadd.f32 %v305, %v608
      %v610 = vpop.f32.mrf.mxu0
      %v611 = vpop.f32.mrf.mxu0
      %v612 = vadd.f32 %v305, %v611
      %v613 = vpop.f32.mrf.mxu0
      %614 = vdwg.mxu0
      %v615 = vmax.f32 %v489, 0.0
      %v616 = vmax.f32 %v492, 0.0
      %v617 = vmax.f32 %v497, 0.0
      %v618 = vmax.f32 %v500, 0.0
      %v619 = vmax.f32 %v505, 0.0
      %v620 = vmax.f32 %v508, 0.0
      %v621 = vmax.f32 %v513, 0.0
      %v622 = vmax.f32 %v516, 0.0
      %v623 = vmax.f32 %v521, 0.0
      %v624 = vmax.f32 %v524, 0.0
      %v625 = vmax.f32 %v529, 0.0
      %v626 = vmax.f32 %v532, 0.0
      %v627 = vmax.f32 %v537, 0.0
      %v628 = vmax.f32 %v540, 0.0
      %v629 = vmax.f32 %v545, 0.0
      %v630 = vmax.f32 %v548, 0.0
      %v631 = vmax.f32 %v553, 0.0
      %v632 = vmax.f32 %v556, 0.0
      %v633 = vmax.f32 %v561, 0.0
      %v634 = vmax.f32 %v564, 0.0
      %v635 = vmax.f32 %v569, 0.0
      %v636 = vmax.f32 %v572, 0.0
      %v637 = vmax.f32 %v577, 0.0
      %v638 = vmax.f32 %v580, 0.0
      %v639 = vmax.f32 %v585, 0.0
      %v640 = vmax.f32 %v588, 0.0
      %v641 = vmax.f32 %v593, 0.0
      %v642 = vmax.f32 %v596, 0.0
      %v643 = vmax.f32 %v601, 0.0
      %v644 = vmax.f32 %v604, 0.0
      %v645 = vmax.f32 %v609, 0.0
      %v646 = vmax.f32 %v612, 0.0
      %v647 = vpack.c.bf16 %v616, %v615
      %v648 = vpack.c.bf16 %v618, %v617
      %v649 = vpack.c.bf16 %v620, %v619
      %v650 = vpack.c.bf16 %v622, %v621
      %v651 = vpack.c.bf16 %v624, %v623
      %v652 = vpack.c.bf16 %v626, %v625
      %v653 = vpack.c.bf16 %v628, %v627
      %v654 = vpack.c.bf16 %v630, %v629
      %v655 = vpack.c.bf16 %v632, %v631
      %v656 = vpack.c.bf16 %v634, %v633
      %v657 = vpack.c.bf16 %v636, %v635
      %v658 = vpack.c.bf16 %v638, %v637
      %v659 = vpack.c.bf16 %v640, %v639
      %v660 = vpack.c.bf16 %v642, %v641
      %v661 = vpack.c.bf16 %v644, %v643
      %v662 = vpack.c.bf16 %v646, %v645
      %663 = vmatprep.subr.bf16.mxu0 0
      %664 = vmatpush1.bf16.msra.mxu0 %v654
      %665 = vmatprep.subr.bf16.mxu0 0
      %666 = vmatpush1.bf16.msra.mxu0 %v653
      %667 = vmatprep.subr.bf16.mxu0 0
      %668 = vmatpush1.bf16.msra.mxu0 %v652
      %669 = vmatprep.subr.bf16.mxu0 0
      %670 = vmatpush1.bf16.msra.mxu0 %v651
      %671 = vmatprep.subr.bf16.mxu0 0
      %672 = vmatpush1.bf16.msra.mxu0 %v650
      %673 = vmatprep.subr.bf16.mxu0 0
      %674 = vmatpush1.bf16.msra.mxu0 %v649
      %675 = vmatprep.subr.bf16.mxu0 0
      %676 = vmatpush1.bf16.msra.mxu0 %v648
      %677 = vmatprep.subr.bf16.mxu0 0
      %678 = vmatpush1.bf16.msra.mxu0 %v647
      %679 = vmatprep.subr.bf16.mxu0 0
      %680 = vmatpush2.bf16.msra.mxu0 %v662
      %681 = vmatprep.subr.bf16.mxu0 0
      %682 = vmatpush2.bf16.msra.mxu0 %v661
      %683 = vmatprep.subr.bf16.mxu0 0
      %684 = vmatpush2.bf16.msra.mxu0 %v660
      %685 = vmatprep.subr.bf16.mxu0 0
      %686 = vmatpush2.bf16.msra.mxu0 %v659
      %687 = vmatprep.subr.bf16.mxu0 0
      %688 = vmatpush2.bf16.msra.mxu0 %v658
      %689 = vmatprep.subr.bf16.mxu0 0
      %690 = vmatpush2.bf16.msra.mxu0 %v657
      %691 = vmatprep.subr.bf16.mxu0 0
      %692 = vmatpush2.bf16.msra.mxu0 %v656
      %693 = vmatprep.subr.bf16.mxu0 0
      %694 = vmatpush2.bf16.msra.mxu0 %v655
      %695 = vmatprep.mubr.bf16.mxu0 998259584
      %696 = vmatmul.mubr.bf16.gmra.mxu0 998259584
      %v697 = vpop.f32.mrf.mxu0
      %v698 = vadd.f32 0.0, %v697
      %v699 = vpop.f32.mrf.mxu0
      %v700 = vpop.f32.mrf.mxu0
      %v701 = vpop.f32.mrf.mxu0
      %702 = vdwg.mxu0
      %v703 = vld [vmem:[%s3] sm:$0xf]
      %v704 = vld [vmem:[%s3 + $0x4] sm:$0xf]
      %v705 = vld [vmem:[%s3 + $0x8] sm:$0xf]
      %v706 = vpack.c.bf16 %v698, %v698
      %v707 = vld [vmem:[%s258] sm:$0x1]
      %vm708 = vcmask 64512
      %v710 = vsel %vm708, %v707, 0
      %vm712 = vcmask 1043456
      %v714 = vsel %vm712, %v705, 0
      %716 = vmatprep.subr.bf16.mxu0 0
      %717 = vmatpush1.bf16.msra.mxu0 0
      %718 = vmatprep.subr.bf16.mxu0 0
      %719 = vmatpush1.bf16.msra.mxu0 0
      %720 = vmatprep.subr.bf16.mxu0 0
      %721 = vmatpush1.bf16.msra.mxu0 0
      %722 = vmatprep.subr.bf16.mxu0 0
      %723 = vmatpush1.bf16.msra.mxu0 0
      %724 = vmatprep.subr.bf16.mxu0 0
      %725 = vmatpush1.bf16.msra.mxu0 0
      %726 = vmatprep.subr.bf16.mxu0 0
      %727 = vmatpush1.bf16.msra.mxu0 0
      %728 = vmatprep.subr.bf16.mxu0 0
      %729 = vmatpush1.bf16.msra.mxu0 0
      %730 = vmatprep.subr.bf16.mxu0 0
      %731 = vmatpush1.bf16.msra.mxu0 %v714
      %732 = vmatprep.subr.bf16.mxu0 0
      %733 = vmatpush2.bf16.msra.mxu0 0
      %734 = vmatprep.subr.bf16.mxu0 0
      %735 = vmatpush2.bf16.msra.mxu0 0
      %736 = vmatprep.subr.bf16.mxu0 0
      %737 = vmatpush2.bf16.msra.mxu0 0
      %738 = vmatprep.subr.bf16.mxu0 0
      %739 = vmatpush2.bf16.msra.mxu0 0
      %740 = vmatprep.subr.bf16.mxu0 0
      %741 = vmatpush2.bf16.msra.mxu0 0
      %742 = vmatprep.subr.bf16.mxu0 0
      %743 = vmatpush2.bf16.msra.mxu0 0
      %744 = vmatprep.subr.bf16.mxu0 0
      %745 = vmatpush2.bf16.msra.mxu0 0
      %746 = vmatprep.subr.bf16.mxu0 0
      %747 = vmatpush2.bf16.msra.mxu0 0
      %748 = vmatprep.mubr.bf16.mxu0 0
      %749 = vmatmul.mubr.bf16.gmra.mxu0 %v710
      %v750 = vpop.f32.mrf.mxu0
      %v751 = vadd.f32 0.0, %v750
      %v752 = vpop.f32.mrf.mxu0
      %v753 = vpop.f32.mrf.mxu0
      %v754 = vpop.f32.mrf.mxu0
      %755 = vdwg.mxu0
      %v758 = vunpack.c.l.b16 %v703
      %v759 = vunpack.c.l.b16 %v704
      %v760 = vpack.c.b16 %v759, %v758
      %vm762 = vcmask 130048
      %v764 = vsel %vm762, %v706, 0
      %766 = vmatprep.subr.bf16.mxu0 0
      %767 = vmatpush1.bf16.msra.mxu0 0
      %768 = vmatprep.subr.bf16.mxu0 0
      %769 = vmatpush1.bf16.msra.mxu0 0
      %770 = vmatprep.subr.bf16.mxu0 0
      %771 = vmatpush1.bf16.msra.mxu0 0
      %772 = vmatprep.subr.bf16.mxu0 0
      %773 = vmatpush1.bf16.msra.mxu0 0
      %774 = vmatprep.subr.bf16.mxu0 0
      %775 = vmatpush1.bf16.msra.mxu0 0
      %776 = vmatprep.subr.bf16.mxu0 0
      %777 = vmatpush1.bf16.msra.mxu0 0
      %778 = vmatprep.subr.bf16.mxu0 0
      %779 = vmatpush1.bf16.msra.mxu0 0
      %780 = vmatprep.subr.bf16.mxu0 0
      %781 = vmatpush1.bf16.msra.mxu0 %v760
      %782 = vmatprep.subr.bf16.mxu0 0
      %783 = vmatpush2.bf16.msra.mxu0 0
      %784 = vmatprep.subr.bf16.mxu0 0
      %785 = vmatpush2.bf16.msra.mxu0 0
      %786 = vmatprep.subr.bf16.mxu0 0
      %787 = vmatpush2.bf16.msra.mxu0 0
      %788 = vmatprep.subr.bf16.mxu0 0
      %789 = vmatpush2.bf16.msra.mxu0 0
      %790 = vmatprep.subr.bf16.mxu0 0
      %791 = vmatpush2.bf16.msra.mxu0 0
      %792 = vmatprep.subr.bf16.mxu0 0
      %793 = vmatpush2.bf16.msra.mxu0 0
      %794 = vmatprep.subr.bf16.mxu0 0
      %795 = vmatpush2.bf16.msra.mxu0 0
      %796 = vmatprep.subr.bf16.mxu0 0
      %797 = vmatpush2.bf16.msra.mxu0 0
      %798 = vmatprep.mubr.bf16.mxu0 0
      %799 = vmatmul.mubr.bf16.gmra.mxu0 %v764
      %v800 = vpop.f32.mrf.mxu0
      %v801 = vadd.f32 %v751, %v800
      %v802 = vpop.f32.mrf.mxu0
      %v803 = vpop.f32.mrf.mxu0
      %v804 = vpop.f32.mrf.mxu0
      %805 = vdwg.mxu0
      %v807 = vrot.slane %v264, 1
      %v809 = vadd.f32 %v801, %v807
      %v810 = vmax.f32 %v809, 0.0
      %v811 = vpack.c.bf16 %v810, %v810
      %v812 = vld [vmem:[%s4] sm:$0xf]
      %v813 = vld [vmem:[%s4 + $0x4] sm:$0xf]
      %v814 = vld [vmem:[%s4 + $0x8] sm:$0xf]
      %v815 = vld [vmem:[%s4 + $0xc] sm:$0xf]
      %v820 = vunpack.c.l.b16 %v812
      %v821 = vunpack.c.l.b16 %v813
      %v822 = vunpack.c.l.b16 %v814
      %v823 = vunpack.c.l.b16 %v815
      %v824 = vpack.c.b16 %v821, %v820
      %v825 = vpack.c.b16 %v823, %v822
      %v828 = vrot.slane %v264, 2
      %vm830 = vcmask 261120
      %v832 = vsel %vm830, %v811, 0
      %834 = vmatprep.subr.bf16.mxu0 0
      %835 = vmatpush1.bf16.msra.mxu0 0
      %836 = vmatprep.subr.bf16.mxu0 0
      %837 = vmatpush1.bf16.msra.mxu0 0
      %838 = vmatprep.subr.bf16.mxu0 0
      %839 = vmatpush1.bf16.msra.mxu0 0
      %840 = vmatprep.subr.bf16.mxu0 0
      %841 = vmatpush1.bf16.msra.mxu0 0
      %842 = vmatprep.subr.bf16.mxu0 0
      %843 = vmatpush1.bf16.msra.mxu0 0
      %844 = vmatprep.subr.bf16.mxu0 0
      %845 = vmatpush1.bf16.msra.mxu0 0
      %846 = vmatprep.subr.bf16.mxu0 0
      %847 = vmatpush1.bf16.msra.mxu0 %v825
      %848 = vmatprep.subr.bf16.mxu0 0
      %849 = vmatpush1.bf16.msra.mxu0 %v824
      %850 = vmatprep.subr.bf16.mxu0 0
      %851 = vmatpush2.bf16.msra.mxu0 0
      %852 = vmatprep.subr.bf16.mxu0 0
      %853 = vmatpush2.bf16.msra.mxu0 0
      %854 = vmatprep.subr.bf16.mxu0 0
      %855 = vmatpush2.bf16.msra.mxu0 0
      %856 = vmatprep.subr.bf16.mxu0 0
      %857 = vmatpush2.bf16.msra.mxu0 0
      %858 = vmatprep.subr.bf16.mxu0 0
      %859 = vmatpush2.bf16.msra.mxu0 0
      %860 = vmatprep.subr.bf16.mxu0 0
      %861 = vmatpush2.bf16.msra.mxu0 0
      %862 = vmatprep.subr.bf16.mxu0 0
      %863 = vmatpush2.bf16.msra.mxu0 0
      %864 = vmatprep.subr.bf16.mxu0 0
      %865 = vmatpush2.bf16.msra.mxu0 0
      %866 = vmatprep.mubr.bf16.mxu0 0
      %867 = vmatmul.mubr.bf16.gmra.mxu0 %v832
      %v868 = vpop.f32.mrf.mxu0
      %v869 = vadd.f32 %v828, %v868
      %v870 = vpop.f32.mrf.mxu0
      %v871 = vpop.f32.mrf.mxu0
      %v872 = vpop.f32.mrf.mxu0
      %873 = vdwg.mxu0
      %874 = vst [vmem:[%s261] sm:$0x1] %v869
      %p875 = scmp.lt.s32.totalorder %s17, 1
      %s876 = scalar_select %p875, %s17, 1
      %s877 = scalar_lea.vmem %s6, %s876
      // Predicated region
      $region45: #{_policy_forward.1} parent=43 // pred_check
        %p878 = pneg %p171
      $region46: #{_policy_forward.1} parent=43 // pred_check_branch
        %880 = sbr.rel (%p878) target = $region48
      $region47: #{_policy_forward.1} parent=43 // pred_region
        _
      $region48: #{_policy_forward.1} parent=43 // pred_fallthru
        _
    $region44: #{_policy_forward.1} parent=5 // pred_fallthru
      _
    %p881 = scmp.le.s32.totalorder 2, %s12
    // Predicated region
    $region49: #{_policy_forward.1} parent=5 // pred_check
      %p882 = pneg %p881
    $region50: #{_policy_forward.1} parent=5 // pred_check_branch
      %884 = sbr.rel (%p882) target = $region52
    $region51: #{_policy_forward.1} parent=5 // pred_region
      %s885 = ssub.s32 %s12, 2
      // Predicated region
      $region53: #{_policy_forward.1} parent=51 // pred_check
        %p886 = pneg %p177
      $region54: #{_policy_forward.1} parent=51 // pred_check_branch
        %888 = sbr.rel (%p886) target = $region56
      $region55: #{_policy_forward.1} parent=51 // pred_region
        %p889 = scmp.lt.s32.totalorder %s18, 1
        %s890 = scalar_select %p889, %s18, 1
        %s891 = scalar_lea.vmem %s6, %s890
      $region56: #{_policy_forward.1} parent=51 // pred_fallthru
        _
    $region52: #{_policy_forward.1} parent=5 // pred_fallthru
      _
  $region6: #{_policy_forward.1} parent=0 // loop_footer
    %s16 = sadd.s32 1, %s12
  $region7: #{_policy_forward.1} parent=0 // loop_footer_branch
    %11 = sbr.rel target = $region3
  $region8: #{_policy_forward.1} parent=0 // loop_exit
    _

</llo_original>
